<compile_context>
chip_gen: v6e
topology: v6e:2x2x1
jax: 0.10.0
libtpu: 0.0.40
codegen_flags: <defaults>
</compile_context>

<pallas_src>
import functools

import jax
import jax.numpy as jnp
from jax.experimental import pallas as pl
from jax.experimental.pallas import tpu as pltpu

LANES = 128
DEFAULT_BLOCK_ROWS = 1024      # 512 KiB per f32 input tile; sweepable
NUM_ACCUM = 4                  # bce_sum, intersection, sigmoid_sum, target_sum


def _dice_bce_kernel(x_ref, t_ref, out_ref, *, n_valid, block_rows,
                     steps_per_split):
    c = pl.program_id(0)            # core-split axis ("parallel")
    i = pl.program_id(1)            # streaming step within the split ("arbitrary")

    @pl.when(i == 0)
    def _init():
        out_ref[...] = jnp.zeros_like(out_ref)

    block_elems = block_rows * LANES
    gb = c * steps_per_split + i    # unclamped global block index
    base = gb * block_elems         # global element index of this tile's elem 0

    x_raw = x_ref[...].astype(jnp.float32)
    t_raw = t_ref[...].astype(jnp.float32)

    def accumulate(x, t, valid):
        # Share exp(-|x|) between BCE's log term and the sigmoid (1 EUP exp).
        e = jnp.exp(-jnp.abs(x))
        # Numerically stable BCE-with-logits: max(x,0) - x*t + log(1+exp(-|x|))
        bce = jnp.maximum(x, 0.0) - x * t + jnp.log1p(e)
        # sigmoid(x) = 1/(1+e) if x>=0 else e/(1+e), with e = exp(-|x|)
        p = jnp.where(x >= 0.0, 1.0, e) / (1.0 + e)
        if valid is not None:
            bce = jnp.where(valid, bce, 0.0)
            p = jnp.where(valid, p, 0.0)
        partial = jnp.concatenate(
            [jnp.sum(bce, axis=0, keepdims=True),
             jnp.sum(p * t, axis=0, keepdims=True),
             jnp.sum(p, axis=0, keepdims=True),
             jnp.sum(t, axis=0, keepdims=True)],
            axis=0)                                # (NUM_ACCUM, LANES)
        out_ref[...] += partial

    fully_valid = (gb + 1) * block_elems <= n_valid

    @pl.when(fully_valid)
    def _hot():
        accumulate(x_raw, t_raw, None)

    @pl.when(jnp.logical_not(fully_valid))
    def _tail():
        row = jax.lax.broadcasted_iota(jnp.int32, (block_rows, LANES), 0)
        lane = jax.lax.broadcasted_iota(jnp.int32, (block_rows, LANES), 1)
        idx = base + row * LANES + lane
        valid = idx < n_valid
        # Zero invalid inputs BEFORE the transcendentals so garbage in the
        # ragged-tail block can never produce NaN/Inf that pollutes the sums.
        x = jnp.where(valid, x_raw, 0.0)
        t = jnp.where(valid, t_raw, 0.0)
        accumulate(x, t, valid)


def dice_bce_loss(inputs, targets, smooth=1.0):
    """Pallas implementation of DiceBCELoss.forward. Returns a scalar f32."""
    if inputs.shape != targets.shape:
        raise ValueError("inputs and targets must have the same shape")
    n = int(inputs.size)                      # static element count

    x_flat = inputs.reshape(-1)               # native dtype; cast happens in-kernel
    t_flat = targets.reshape(-1)

    pad = (-n) % LANES                        # < 128 elems; 0 for typical NCHW sizes
    if pad:
        x_flat = jnp.pad(x_flat, (0, pad))
        t_flat = jnp.pad(t_flat, (0, pad))
    rows = (n + pad) // LANES

    block_rows = min(DEFAULT_BLOCK_ROWS, rows)
    x2 = x_flat.reshape(rows, LANES)
    t2 = t_flat.reshape(rows, LANES)

    num_blocks = pl.cdiv(rows, block_rows)
    num_splits = 2 if num_blocks >= 2 else 1  # one split per v7x TensorCore
    steps = pl.cdiv(num_blocks, num_splits)

    def in_map(c, i):
        # Clamp so trailing (fully masked) steps re-read the last valid block.
        return (jnp.minimum(c * steps + i, num_blocks - 1), 0)

    in_spec = pl.BlockSpec((block_rows, LANES), in_map)
    out_spec = pl.BlockSpec((None, NUM_ACCUM, LANES), lambda c, i: (c, 0, 0))

    # 2 inputs x 2 pipeline buffers x tile bytes, plus headroom; safe on all gens.
    tile_bytes = block_rows * LANES * (x2.dtype.itemsize + t2.dtype.itemsize)
    vmem_limit = int(max(4 * tile_bytes + (4 << 20), 32 << 20))

    kernel = functools.partial(
        _dice_bce_kernel, n_valid=n, block_rows=block_rows,
        steps_per_split=steps)

    partials = pl.pallas_call(
        kernel,
        out_shape=jax.ShapeDtypeStruct((num_splits, NUM_ACCUM, LANES),
                                       jnp.float32),
        grid_spec=pltpu.PrefetchScalarGridSpec(
            num_scalar_prefetch=0,
            grid=(num_splits, steps),
            in_specs=[in_spec, in_spec],
            out_specs=out_spec,
        ),
        compiler_params=pltpu.CompilerParams(
            dimension_semantics=("parallel", "arbitrary"),
            vmem_limit_bytes=vmem_limit,
        ),
    )(x2, t2)

    # Tiny epilogue in plain JAX (lane/split reduction + loss formula).
    sums = jnp.sum(partials, axis=(0, 2))             # (4,)
    bce_mean = sums[0] / jnp.float32(n)
    dice_loss = 1.0 - (2.0 * sums[1] + smooth) / (sums[2] + sums[3] + smooth)
    return bce_mean + dice_loss


def _reference(inputs, targets, smooth=1.0):
    x = inputs.reshape(-1).astype(jnp.float32)
    t = targets.reshape(-1).astype(jnp.float32)
    bce = jnp.mean(jnp.maximum(x, 0.0) - x * t + jnp.log1p(jnp.exp(-jnp.abs(x))))
    p = jax.nn.sigmoid(x)
    inter = jnp.sum(p * t)
    dice = 1.0 - (2.0 * inter + smooth) / (jnp.sum(p) + jnp.sum(t) + smooth)
    return bce + dice


if __name__ == "__main__":
    key = jax.random.PRNGKey(0)

    # Primary small NCHW check (logits + binary labels), as the module implies.
    k1, k2, k3, k4, k5, k6 = jax.random.split(key, 6)
    x = jax.random.normal(k1, (2, 4, 16, 16), dtype=jnp.float32)
    y = (jax.random.uniform(k2, (2, 4, 16, 16)) > 0.5).astype(jnp.float32)
    loss = jax.block_until_ready(dice_bce_loss(x, y, smooth=1.0))
    ref = jax.block_until_ready(_reference(x, y, smooth=1.0))
    assert jnp.allclose(loss, ref, rtol=1e-4, atol=1e-5), (loss, ref)

    # Ragged shape (exercises the in-kernel tail mask + <128-element pad).
    xr = jax.random.normal(k3, (1, 3, 17, 19), dtype=jnp.float32)
    yr = (jax.random.uniform(k4, (1, 3, 17, 19)) > 0.5).astype(jnp.float32)
    loss_r = jax.block_until_ready(dice_bce_loss(xr, yr, smooth=1.0))
    ref_r = jax.block_until_ready(_reference(xr, yr, smooth=1.0))
    assert jnp.allclose(loss_r, ref_r, rtol=1e-4, atol=1e-5), (loss_r, ref_r)

    # Multi-block shape (exercises the 2-way core-parallel split path).
    xm = jax.random.normal(k5, (2, 8, 128, 128), dtype=jnp.float32)
    ym = (jax.random.uniform(k6, (2, 8, 128, 128)) > 0.5).astype(jnp.float32)
    loss_m = jax.block_until_ready(dice_bce_loss(xm, ym, smooth=1.0))
    ref_m = jax.block_until_ready(_reference(xm, ym, smooth=1.0))
    assert jnp.allclose(loss_m, ref_m, rtol=1e-4, atol=1e-5), (loss_m, ref_m)

    print("KERNEL_OK")
</pallas_src>

<mosaic_0001>
module attributes {stable_mosaic.version = 11 : i64} {
  func.func @_dice_bce_kernel(%arg0: i32, %arg1: i32, %arg2: memref<16x128xf32, #tpu.memory_space<vmem>>, %arg3: memref<16x128xf32, #tpu.memory_space<vmem>>, %arg4: memref<1x4x128xf32, #tpu.memory_space<vmem>>) attributes {dimension_semantics = [#tpu.dimension_semantics<parallel>, #tpu.dimension_semantics<arbitrary>], iteration_bounds = array<i64: 1, 1>, scalar_prefetch = 0 : i64, scratch_operands = 0 : i64, tpu.core_type = #tpu.core_type<tc>, window_params = [{transform_indices = @transform_0, window_bounds = array<i64: 16, 128>}, {transform_indices = @transform_1, window_bounds = array<i64: 16, 128>}, {transform_indices = @transform_2, window_bounds = array<i64: 1, 4, 128>}]} {
    %c0_i32 = arith.constant 0 : i32
    %0 = arith.cmpi eq, %arg1, %c0_i32 : i32
    %1 = arith.extui %0 : i1 to i32
    %c0_i32_0 = arith.constant 0 : i32
    %2 = arith.cmpi ne, %1, %c0_i32_0 : i32
    scf.if %2 {
      %cst = arith.constant 0.000000e+00 : f32
      %16 = vector.broadcast %cst : f32 to vector<4x128xf32>
      %c0_9 = arith.constant 0 : index
      %c0_10 = arith.constant 0 : index
      %c0_11 = arith.constant 0 : index
      %17 = vector.load %arg4[%c0_9, %c0_10, %c0_11] : memref<1x4x128xf32, #tpu.memory_space<vmem>>, vector<1x4x128xf32>
      %18 = vector.shape_cast %17 : vector<1x4x128xf32> to vector<4x128xf32>
      %19 = vector.shape_cast %16 : vector<4x128xf32> to vector<1x4x128xf32>
      tpu.vector_store %arg4[%c0_9, %c0_10, %c0_11], %19 {strides = array<i32>} : memref<1x4x128xf32, #tpu.memory_space<vmem>>, vector<1x4x128xf32>,
    } else {
    }
    %c1_i32 = arith.constant 1 : i32
    %3 = arith.muli %arg0, %c1_i32 : i32
    %4 = arith.addi %3, %arg1 : i32
    %c2048_i32 = arith.constant 2048 : i32
    %5 = arith.muli %4, %c2048_i32 : i32
    %c0 = arith.constant 0 : index
    %c0_1 = arith.constant 0 : index
    %6 = vector.load %arg2[%c0, %c0_1] : memref<16x128xf32, #tpu.memory_space<vmem>>, vector<16x128xf32>
    %c0_2 = arith.constant 0 : index
    %c0_3 = arith.constant 0 : index
    %7 = vector.load %arg3[%c0_2, %c0_3] : memref<16x128xf32, #tpu.memory_space<vmem>>, vector<16x128xf32>
    %c1_i32_4 = arith.constant 1 : i32
    %8 = arith.addi %4, %c1_i32_4 : i32
    %c2048_i32_5 = arith.constant 2048 : i32
    %9 = arith.muli %8, %c2048_i32_5 : i32
    %c2048_i32_6 = arith.constant 2048 : i32
    %10 = arith.cmpi sle, %9, %c2048_i32_6 : i32
    %11 = arith.extui %10 : i1 to i32
    %c0_i32_7 = arith.constant 0 : i32
    %12 = arith.cmpi ne, %11, %c0_i32_7 : i32
    scf.if %12 {
      %16 = math.absf %6 : vector<16x128xf32>
      %cst = arith.constant 0.000000e+00 : f32
      %17 = vector.broadcast %cst : f32 to vector<16x128xf32>
      %18 = arith.subf %17, %16 : vector<16x128xf32>
      %19 = math.exp %18 : vector<16x128xf32>
      %cst_9 = arith.constant 0.000000e+00 : f32
      %20 = vector.broadcast %cst_9 : f32 to vector<16x128xf32>
      %21 = arith.maximumf %6, %20 : vector<16x128xf32>
      %22 = arith.mulf %6, %7 : vector<16x128xf32>
      %23 = arith.subf %21, %22 : vector<16x128xf32>
      %24 = math.log1p %19 : vector<16x128xf32>
      %25 = arith.addf %23, %24 : vector<16x128xf32>
      %cst_10 = arith.constant 0.000000e+00 : f32
      %26 = vector.broadcast %cst_10 : f32 to vector<16x128xf32>
      %27 = arith.cmpf oge, %6, %26 : vector<16x128xf32>
      %cst_11 = arith.constant 1.000000e+00 : f32
      %28 = vector.broadcast %cst_11 : f32 to vector<16x128xf32>
      %29 = arith.select %27, %28, %19 : vector<16x128xi1>, vector<16x128xf32>
      %cst_12 = arith.constant 1.000000e+00 : f32
      %30 = vector.broadcast %cst_12 : f32 to vector<16x128xf32>
      %31 = arith.addf %30, %19 : vector<16x128xf32>
      %32 = arith.divf %29, %31 : vector<16x128xf32>
      %cst_13 = arith.constant dense<0.000000e+00> : vector<128xf32>
      %33 = vector.multi_reduction <add>, %25, %cst_13 [0] : vector<16x128xf32> to vector<128xf32>
      %34 = vector.shape_cast %33 : vector<128xf32> to vector<1x128xf32>
      %35 = arith.mulf %32, %7 : vector<16x128xf32>
      %cst_14 = arith.constant dense<0.000000e+00> : vector<128xf32>
      %36 = vector.multi_reduction <add>, %35, %cst_14 [0] : vector<16x128xf32> to vector<128xf32>
      %37 = vector.shape_cast %36 : vector<128xf32> to vector<1x128xf32>
      %cst_15 = arith.constant dense<0.000000e+00> : vector<128xf32>
      %38 = vector.multi_reduction <add>, %32, %cst_15 [0] : vector<16x128xf32> to vector<128xf32>
      %39 = vector.shape_cast %38 : vector<128xf32> to vector<1x128xf32>
      %cst_16 = arith.constant dense<0.000000e+00> : vector<128xf32>
      %40 = vector.multi_reduction <add>, %7, %cst_16 [0] : vector<16x128xf32> to vector<128xf32>
      %41 = vector.shape_cast %40 : vector<128xf32> to vector<1x128xf32>
      %42 = tpu.concatenate %34, %37, %39, %41 in 0 : vector<1x128xf32>, vector<1x128xf32>, vector<1x128xf32>, vector<1x128xf32> -> vector<4x128xf32>
      %c0_17 = arith.constant 0 : index
      %c0_18 = arith.constant 0 : index
      %c0_19 = arith.constant 0 : index
      %43 = vector.load %arg4[%c0_17, %c0_18, %c0_19] : memref<1x4x128xf32, #tpu.memory_space<vmem>>, vector<1x4x128xf32>
      %44 = vector.shape_cast %43 : vector<1x4x128xf32> to vector<4x128xf32>
      %45 = arith.addf %44, %42 : vector<4x128xf32>
      %c0_20 = arith.constant 0 : index
      %c0_21 = arith.constant 0 : index
      %c0_22 = arith.constant 0 : index
      %46 = vector.load %arg4[%c0_20, %c0_21, %c0_22] : memref<1x4x128xf32, #tpu.memory_space<vmem>>, vector<1x4x128xf32>
      %47 = vector.shape_cast %46 : vector<1x4x128xf32> to vector<4x128xf32>
      %48 = vector.shape_cast %45 : vector<4x128xf32> to vector<1x4x128xf32>
      tpu.vector_store %arg4[%c0_20, %c0_21, %c0_22], %48 {strides = array<i32>} : memref<1x4x128xf32, #tpu.memory_space<vmem>>, vector<1x4x128xf32>,
    } else {
    }
    %true = arith.constant true
    %13 = arith.xori %10, %true : i1
    %14 = arith.extui %13 : i1 to i32
    %c0_i32_8 = arith.constant 0 : i32
    %15 = arith.cmpi ne, %14, %c0_i32_8 : i32
    scf.if %15 {
      %16 = tpu.iota {dimensions = array<i32: 0>} : vector<16x128xi32>
      %17 = tpu.iota {dimensions = array<i32: 1>} : vector<16x128xi32>
      %c128_i32 = arith.constant 128 : i32
      %18 = vector.broadcast %c128_i32 : i32 to vector<16x128xi32>
      %19 = arith.muli %16, %18 : vector<16x128xi32>
      %20 = vector.broadcast %5 : i32 to vector<16x128xi32>
      %21 = arith.addi %20, %19 : vector<16x128xi32>
      %22 = arith.addi %21, %17 : vector<16x128xi32>
      %c2048_i32_9 = arith.constant 2048 : i32
      %23 = vector.broadcast %c2048_i32_9 : i32 to vector<16x128xi32>
      %24 = arith.cmpi slt, %22, %23 : vector<16x128xi32>
      %cst = arith.constant 0.000000e+00 : f32
      %25 = vector.broadcast %cst : f32 to vector<16x128xf32>
      %26 = arith.select %24, %6, %25 : vector<16x128xi1>, vector<16x128xf32>
      %cst_10 = arith.constant 0.000000e+00 : f32
      %27 = vector.broadcast %cst_10 : f32 to vector<16x128xf32>
      %28 = arith.select %24, %7, %27 : vector<16x128xi1>, vector<16x128xf32>
      %29 = math.absf %26 : vector<16x128xf32>
      %cst_11 = arith.constant 0.000000e+00 : f32
      %30 = vector.broadcast %cst_11 : f32 to vector<16x128xf32>
      %31 = arith.subf %30, %29 : vector<16x128xf32>
      %32 = math.exp %31 : vector<16x128xf32>
      %cst_12 = arith.constant 0.000000e+00 : f32
      %33 = vector.broadcast %cst_12 : f32 to vector<16x128xf32>
      %34 = arith.maximumf %26, %33 : vector<16x128xf32>
      %35 = arith.mulf %26, %28 : vector<16x128xf32>
      %36 = arith.subf %34, %35 : vector<16x128xf32>
      %37 = math.log1p %32 : vector<16x128xf32>
      %38 = arith.addf %36, %37 : vector<16x128xf32>
      %cst_13 = arith.constant 0.000000e+00 : f32
      %39 = vector.broadcast %cst_13 : f32 to vector<16x128xf32>
      %40 = arith.cmpf oge, %26, %39 : vector<16x128xf32>
      %cst_14 = arith.constant 1.000000e+00 : f32
      %41 = vector.broadcast %cst_14 : f32 to vector<16x128xf32>
      %42 = arith.select %40, %41, %32 : vector<16x128xi1>, vector<16x128xf32>
      %cst_15 = arith.constant 1.000000e+00 : f32
      %43 = vector.broadcast %cst_15 : f32 to vector<16x128xf32>
      %44 = arith.addf %43, %32 : vector<16x128xf32>
      %45 = arith.divf %42, %44 : vector<16x128xf32>
      %cst_16 = arith.constant 0.000000e+00 : f32
      %46 = vector.broadcast %cst_16 : f32 to vector<16x128xf32>
      %47 = arith.select %24, %38, %46 : vector<16x128xi1>, vector<16x128xf32>
      %cst_17 = arith.constant 0.000000e+00 : f32
      %48 = vector.broadcast %cst_17 : f32 to vector<16x128xf32>
      %49 = arith.select %24, %45, %48 : vector<16x128xi1>, vector<16x128xf32>
      %cst_18 = arith.constant dense<0.000000e+00> : vector<128xf32>
      %50 = vector.multi_reduction <add>, %47, %cst_18 [0] : vector<16x128xf32> to vector<128xf32>
      %51 = vector.shape_cast %50 : vector<128xf32> to vector<1x128xf32>
      %52 = arith.mulf %49, %28 : vector<16x128xf32>
      %cst_19 = arith.constant dense<0.000000e+00> : vector<128xf32>
      %53 = vector.multi_reduction <add>, %52, %cst_19 [0] : vector<16x128xf32> to vector<128xf32>
      %54 = vector.shape_cast %53 : vector<128xf32> to vector<1x128xf32>
      %cst_20 = arith.constant dense<0.000000e+00> : vector<128xf32>
      %55 = vector.multi_reduction <add>, %49, %cst_20 [0] : vector<16x128xf32> to vector<128xf32>
      %56 = vector.shape_cast %55 : vector<128xf32> to vector<1x128xf32>
      %cst_21 = arith.constant dense<0.000000e+00> : vector<128xf32>
      %57 = vector.multi_reduction <add>, %28, %cst_21 [0] : vector<16x128xf32> to vector<128xf32>
      %58 = vector.shape_cast %57 : vector<128xf32> to vector<1x128xf32>
      %59 = tpu.concatenate %51, %54, %56, %58 in 0 : vector<1x128xf32>, vector<1x128xf32>, vector<1x128xf32>, vector<1x128xf32> -> vector<4x128xf32>
      %c0_22 = arith.constant 0 : index
      %c0_23 = arith.constant 0 : index
      %c0_24 = arith.constant 0 : index
      %60 = vector.load %arg4[%c0_22, %c0_23, %c0_24] : memref<1x4x128xf32, #tpu.memory_space<vmem>>, vector<1x4x128xf32>
      %61 = vector.shape_cast %60 : vector<1x4x128xf32> to vector<4x128xf32>
      %62 = arith.addf %61, %59 : vector<4x128xf32>
      %c0_25 = arith.constant 0 : index
      %c0_26 = arith.constant 0 : index
      %c0_27 = arith.constant 0 : index
      %63 = vector.load %arg4[%c0_25, %c0_26, %c0_27] : memref<1x4x128xf32, #tpu.memory_space<vmem>>, vector<1x4x128xf32>
      %64 = vector.shape_cast %63 : vector<1x4x128xf32> to vector<4x128xf32>
      %65 = vector.shape_cast %62 : vector<4x128xf32> to vector<1x4x128xf32>
      tpu.vector_store %arg4[%c0_25, %c0_26, %c0_27], %65 {strides = array<i32>} : memref<1x4x128xf32, #tpu.memory_space<vmem>>, vector<1x4x128xf32>,
    } else {
    }
    return
  }
  func.func @transform_0(%arg0: i32, %arg1: i32) -> (i32, i32) {
    %c1_i32 = arith.constant 1 : i32
    %0 = arith.muli %arg0, %c1_i32 : i32
    %1 = arith.addi %0, %arg1 : i32
    %c0_i32 = arith.constant 0 : i32
    %2 = arith.minsi %1, %c0_i32 : i32
    %c0_i32_0 = arith.constant 0 : i32
    %c0_i32_1 = arith.constant 0 : i32
    return %2, %c0_i32_0 : i32, i32
  }
  func.func @transform_1(%arg0: i32, %arg1: i32) -> (i32, i32) {
    %c1_i32 = arith.constant 1 : i32
    %0 = arith.muli %arg0, %c1_i32 : i32
    %1 = arith.addi %0, %arg1 : i32
    %c0_i32 = arith.constant 0 : i32
    %2 = arith.minsi %1, %c0_i32 : i32
    %c0_i32_0 = arith.constant 0 : i32
    %c0_i32_1 = arith.constant 0 : i32
    return %2, %c0_i32_0 : i32, i32
  }
  func.func @transform_2(%arg0: i32, %arg1: i32) -> (i32, i32, i32) {
    %c0_i32 = arith.constant 0 : i32
    %c0_i32_0 = arith.constant 0 : i32
    %c0_i32_1 = arith.constant 0 : i32
    return %arg0, %c0_i32, %c0_i32_0 : i32, i32, i32
  }
}

</mosaic_0001>

<llo_original>
// kernel: tpu_custom_call.1
$region0: #{tpu_custom_call.1}
  #allocation0 [shape = 'u32[]', space=smem, size = 0x4, offset = 0x4, fixed_abs, tag = 'smem constant byte address 0x4 - core index']
  #allocation1 [shape = 'u32[144,128]{1,0:T(1,128)}', space=vmem, size = 0x12000, scoped, tag = 'internal scratch']
  %s0 = inlined_call_operand.hbm [shape: f32[16,128], index: 0, kind: input, shape index: {}]
  %s1 = inlined_call_operand.hbm [shape: f32[16,128], index: 1, kind: input, shape index: {}]
  %s2 = inlined_call_operand.hbm [shape: f32[1,4,128], index: 2, kind: output, shape index: {}]
  %s3 = sld [smem:[#allocation0]]
  $region38: #{tpu_custom_call.1} parent=0
    _
  %s5 = ssub.s32 1, %s3
  %s6 = scalar_select 0, %s5, %s3
  $region1: #{tpu_custom_call.1} parent=0
    #allocation2 [shape = 'u8[8192]{0}', space=vmem, size = 0x2000, scoped, tag = 'input window, operand 0, single buffered']
    #allocation3 [shape = 's32[1]{0}', space=sflag, size = 0x4, scoped, tag = 'scoped memory for tpu_custom_call.1']
    #allocation4 [shape = 's32[1]{0}', space=sflag, size = 0x4, scoped, tag = 'scoped memory for tpu_custom_call.1']
    #allocation5 [shape = 'u8[8192]{0}', space=vmem, size = 0x2000, scoped, tag = 'input window, operand 1, single buffered']
    #allocation6 [shape = 's32[1]{0}', space=sflag, size = 0x4, scoped, tag = 'scoped memory for tpu_custom_call.1']
    #allocation7 [shape = 'u8[2048]{0}', space=vmem, size = 0x800, scoped, tag = 'output window, operand 0, single buffered']
    %7 = vsyncpa [#allocation3], 0
    %8 = vsyncpa [#allocation6], 0
    %9 = vsyncpa [#allocation4], 0
    // Predicated region
    $region2: #{tpu_custom_call.1} parent=1 // pred_check
      _
    $region3: #{tpu_custom_call.1} parent=1 // pred_check_branch
      %11 = sbr.rel (0) target = $region5
    $region4: #{tpu_custom_call.1} parent=1 // pred_region
      %s12 = sadd.s32 0, 0
      %p13 = scmp.lt.s32.totalorder %s12, 0
      %s14 = scalar_select %p13, %s12, 0
      %s15 = smul.u32 2, %s14
      %s17 = ssub.s32 256, 256
      %18 = vsyncadd [#allocation3], %s17
      %s19 = smul.addr %s15, 128
      %s20 = scalar_lea.hbm %s0, %s19
      %s21 = sshll.u32 [#allocation2], 4
      %s22 = int_to_ptr.vmem [resolvable:$true] %s21
      %27 = dma.hbm_to_vmem [thread:$0]  %s20, 256, %s22, [#allocation3], 128, 128, 8
    $region5: #{tpu_custom_call.1} parent=1 // pred_fallthru
      _
    // Predicated region
    $region6: #{tpu_custom_call.1} parent=1 // pred_check
      _
    $region7: #{tpu_custom_call.1} parent=1 // pred_check_branch
      %29 = sbr.rel (0) target = $region9
    $region8: #{tpu_custom_call.1} parent=1 // pred_region
      %s30 = sadd.s32 0, 0
      %p31 = scmp.lt.s32.totalorder %s30, 0
      %s32 = scalar_select %p31, %s30, 0
      %s33 = smul.u32 2, %s32
      %s35 = ssub.s32 256, 256
      %36 = vsyncadd [#allocation6], %s35
      %s37 = smul.addr %s33, 128
      %s38 = scalar_lea.hbm %s1, %s37
      %s39 = sshll.u32 [#allocation5], 4
      %s40 = int_to_ptr.vmem [resolvable:$true] %s39
      %45 = dma.hbm_to_vmem [thread:$0]  %s38, 256, %s40, [#allocation6], 128, 128, 8
    $region9: #{tpu_custom_call.1} parent=1 // pred_fallthru
      _
    // Predicated region
    $region10: #{tpu_custom_call.1} parent=1 // pred_check
      _
    $region11: #{tpu_custom_call.1} parent=1 // pred_check_branch
      %47 = sbr.rel (0) target = $region13
    $region12: #{tpu_custom_call.1} parent=1 // pred_region
      %48 = dma.done [#allocation3], 256
    $region13: #{tpu_custom_call.1} parent=1 // pred_fallthru
      _
    // Predicated region
    $region14: #{tpu_custom_call.1} parent=1 // pred_check
      _
    $region15: #{tpu_custom_call.1} parent=1 // pred_check_branch
      %50 = sbr.rel (0) target = $region17
    $region16: #{tpu_custom_call.1} parent=1 // pred_region
      %51 = dma.done [#allocation6], 256
    $region17: #{tpu_custom_call.1} parent=1 // pred_fallthru
      _
    %s52 = sadd.s32 0, 0
    %p53 = scmp.lt.s32.totalorder %s52, 0
    %s54 = scalar_select %p53, %s52, 0
    %s55 = smul.u32 2, %s54
    %s56 = sadd.s32 0, 0
    %p57 = scmp.lt.s32.totalorder %s56, 0
    %s58 = scalar_select %p57, %s56, 0
    %s59 = smul.u32 2, %s58
    %p60 = scmp.eq.s32.totalorder 0, 0
    // Predicated region
    $region18: #{tpu_custom_call.1} parent=1 // pred_check
      %p61 = pneg %p60
    $region19: #{tpu_custom_call.1} parent=1 // pred_check_branch
      %63 = sbr.rel (%p61) target = $region21
    $region20: #{tpu_custom_call.1} parent=1 // pred_region
      %64 = vst [vmem:[#allocation7] sm:$0xf] 0.0
    $region21: #{tpu_custom_call.1} parent=1 // pred_fallthru
      _
    %s65 = sadd.s32 0, 0
    %s66 = smul.u32 %s65, 2048
    %v67 = vld [vmem:[#allocation2] sm:$0xff]
    %v68 = vld [vmem:[#allocation2 + $0x8] sm:$0xff]
    %v69 = vld [vmem:[#allocation5] sm:$0xff]
    %v70 = vld [vmem:[#allocation5 + $0x8] sm:$0xff]
    %s71 = sadd.s32 %s65, 1
    %s72 = smul.u32 %s71, 2048
    %p73 = scmp.le.s32.totalorder %s72, 2048
    // Predicated region
    $region22: #{tpu_custom_call.1} parent=1 // pred_check
      %p74 = pneg %p73
    $region23: #{tpu_custom_call.1} parent=1 // pred_check_branch
      %76 = sbr.rel (%p74) target = $region25
    $region24: #{tpu_custom_call.1} parent=1 // pred_region
      %v77 = vand.u32 2147483647, %v67
      %v78 = vand.u32 2147483647, %v68
      %v79 = vsub.f32 0.0, %v77
      %v80 = vsub.f32 0.0, %v78
      %v81 = vmul.f32 %v79, 1.442695
      %v82 = vpow.pop %v81
      %v83 = vmul.f32 %v80, 1.442695
      %v84 = vpow.pop %v83
      %v85 = vmax.f32 %v67, 0.0
      %v86 = vmax.f32 %v68, 0.0
      %v87 = vmul.f32 %v67, %v69
      %v88 = vmul.f32 %v68, %v70
      %v89 = vsub.f32 %v85, %v87
      %v90 = vsub.f32 %v86, %v88
      %v91 = vadd.f32 %v82, 1.0
      %v92 = vlog2.pop %v91
      %v93 = vmul.f32 %v92, 0.6931472
      %v94 = vmul.f32 -0.5, %v82
      %v95 = vadd.f32 %v94, 1.0
      %v96 = vmul.f32 %v95, %v82
      %v97 = vand.u32 2147483647, %v82
      %vm98 = vcmp.lt.f32.partialorder %v97, 0.0004427343
      %v99 = vsel %vm98, %v96, %v93
      %v100 = vadd.f32 %v84, 1.0
      %v101 = vlog2.pop %v100
      %v102 = vmul.f32 %v101, 0.6931472
      %v103 = vmul.f32 -0.5, %v84
      %v104 = vadd.f32 %v103, 1.0
      %v105 = vmul.f32 %v104, %v84
      %v106 = vand.u32 2147483647, %v84
      %vm107 = vcmp.lt.f32.partialorder %v106, 0.0004427343
      %v108 = vsel %vm107, %v105, %v102
      %v109 = vadd.f32 %v89, %v99
      %v110 = vadd.f32 %v90, %v108
      %vm111 = vcmp.ge.f32.partialorder %v67, 0.0
      %vm112 = vcmp.ge.f32.partialorder %v68, 0.0
      %v113 = vsel %vm111, 1.0, %v82
      %v114 = vsel %vm112, 1.0, %v84
      %v115 = vadd.f32 %v82, 1.0
      %v116 = vadd.f32 %v84, 1.0
      %v117 = vrcp.pop %v115
      %v118 = vmul.f32 %v113, %v117
      %v119 = vrcp.pop %v116
      %v120 = vmul.f32 %v114, %v119
      %v121 = vadd.f32 %v109, %v110
      %v122 = vrot.slane %v121, 4
      %v123 = vadd.f32 %v121, %v122
      %v124 = vrot.slane %v123, 2
      %v125 = vadd.f32 %v123, %v124
      %v126 = vrot.slane %v125, 1
      %v127 = vadd.f32 %v125, %v126
      %v128 = vmul.f32 %v118, %v69
      %v129 = vmul.f32 %v120, %v70
      %v130 = vadd.f32 %v128, %v129
      %v131 = vrot.slane %v130, 4
      %v132 = vadd.f32 %v130, %v131
      %v133 = vrot.slane %v132, 2
      %v134 = vadd.f32 %v132, %v133
      %v135 = vrot.slane %v134, 1
      %v136 = vadd.f32 %v134, %v135
      %v137 = vadd.f32 %v118, %v120
      %v138 = vrot.slane %v137, 4
      %v139 = vadd.f32 %v137, %v138
      %v140 = vrot.slane %v139, 2
      %v141 = vadd.f32 %v139, %v140
      %v142 = vrot.slane %v141, 1
      %v143 = vadd.f32 %v141, %v142
      %v144 = vadd.f32 %v69, %v70
      %v145 = vrot.slane %v144, 4
      %v146 = vadd.f32 %v144, %v145
      %v147 = vrot.slane %v146, 2
      %v148 = vadd.f32 %v146, %v147
      %v149 = vrot.slane %v148, 1
      %v150 = vadd.f32 %v148, %v149
      %vm151 = vcmask 1040384
      %v152 = vsel %vm151, %v127, %v136
      %vm153 = vcmask 1041408
      %v154 = vsel %vm153, %v152, %v143
      %vm155 = vcmask 1042432
      %v156 = vsel %vm155, %v154, %v150
      %v157 = vld [vmem:[#allocation7] sm:$0xf]
      %v158 = vadd.f32 %v157, %v156
      %159 = vst [vmem:[#allocation7] sm:$0xf] %v158
    $region25: #{tpu_custom_call.1} parent=1 // pred_fallthru
      _
    %p160 = scmp.gt.s32.totalorder %s72, 2048
    // Predicated region
    $region26: #{tpu_custom_call.1} parent=1 // pred_check
      %p161 = pneg %p160
    $region27: #{tpu_custom_call.1} parent=1 // pred_check_branch
      %163 = sbr.rel (%p161) target = $region29
    $region28: #{tpu_custom_call.1} parent=1 // pred_region
      %v164 = vlaneseq
      %v165 = vshrl.u32 %v164, 7
      %v166 = vadd.s32 %v165, 8
      %v167 = vlaneseq
      %v168 = vand.u32 %v167, 127
      %v169 = vmul.u32 %v165, 128
      %v170 = vmul.u32 %v166, 128
      %v171 = vstv %s66
      %v172 = vadd.s32 %v171, %v169
      %v173 = vadd.s32 %v171, %v170
      %v174 = vadd.s32 %v172, %v168
      %v175 = vadd.s32 %v173, %v168
      %vm176 = vcmp.lt.s32.totalorder %v174, 2048
      %vm177 = vcmp.lt.s32.totalorder %v175, 2048
      %v178 = vsel %vm176, %v67, 0.0
      %v179 = vsel %vm177, %v68, 0.0
      %v180 = vsel %vm176, %v69, 0.0
      %v181 = vsel %vm177, %v70, 0.0
      %v182 = vand.u32 2147483647, %v178
      %v183 = vand.u32 2147483647, %v179
      %v184 = vsub.f32 0.0, %v182
      %v185 = vsub.f32 0.0, %v183
      %v186 = vmul.f32 %v184, 1.442695
      %v187 = vpow.pop %v186
      %v188 = vmul.f32 %v185, 1.442695
      %v189 = vpow.pop %v188
      %v190 = vmax.f32 %v178, 0.0
      %v191 = vmax.f32 %v179, 0.0
      %v192 = vmul.f32 %v178, %v180
      %v193 = vmul.f32 %v179, %v181
      %v194 = vsub.f32 %v190, %v192
      %v195 = vsub.f32 %v191, %v193
      %v196 = vadd.f32 %v187, 1.0
      %v197 = vlog2.pop %v196
      %v198 = vmul.f32 %v197, 0.6931472
      %v199 = vmul.f32 -0.5, %v187
      %v200 = vadd.f32 %v199, 1.0
      %v201 = vmul.f32 %v200, %v187
      %v202 = vand.u32 2147483647, %v187
      %vm203 = vcmp.lt.f32.partialorder %v202, 0.0004427343
      %v204 = vsel %vm203, %v201, %v198
      %v205 = vadd.f32 %v189, 1.0
      %v206 = vlog2.pop %v205
      %v207 = vmul.f32 %v206, 0.6931472
      %v208 = vmul.f32 -0.5, %v189
      %v209 = vadd.f32 %v208, 1.0
      %v210 = vmul.f32 %v209, %v189
      %v211 = vand.u32 2147483647, %v189
      %vm212 = vcmp.lt.f32.partialorder %v211, 0.0004427343
      %v213 = vsel %vm212, %v210, %v207
      %v214 = vadd.f32 %v194, %v204
      %v215 = vadd.f32 %v195, %v213
      %vm216 = vcmp.ge.f32.partialorder %v178, 0.0
      %vm217 = vcmp.ge.f32.partialorder %v179, 0.0
      %v218 = vsel %vm216, 1.0, %v187
      %v219 = vsel %vm217, 1.0, %v189
      %v220 = vadd.f32 %v187, 1.0
      %v221 = vadd.f32 %v189, 1.0
      %v222 = vrcp.pop %v220
      %v223 = vmul.f32 %v218, %v222
      %v224 = vrcp.pop %v221
      %v225 = vmul.f32 %v219, %v224
      %v226 = vsel %vm176, %v214, 0.0
      %v227 = vsel %vm177, %v215, 0.0
      %v228 = vsel %vm176, %v223, 0.0
      %v229 = vsel %vm177, %v225, 0.0
      %v230 = vadd.f32 %v226, %v227
      %v231 = vrot.slane %v230, 4
      %v232 = vadd.f32 %v230, %v231
      %v233 = vrot.slane %v232, 2
      %v234 = vadd.f32 %v232, %v233
      %v235 = vrot.slane %v234, 1
      %v236 = vadd.f32 %v234, %v235
      %v237 = vmul.f32 %v228, %v180
      %v238 = vmul.f32 %v229, %v181
      %v239 = vadd.f32 %v237, %v238
      %v240 = vrot.slane %v239, 4
      %v241 = vadd.f32 %v239, %v240
      %v242 = vrot.slane %v241, 2
      %v243 = vadd.f32 %v241, %v242
      %v244 = vrot.slane %v243, 1
      %v245 = vadd.f32 %v243, %v244
      %v246 = vadd.f32 %v228, %v229
      %v247 = vrot.slane %v246, 4
      %v248 = vadd.f32 %v246, %v247
      %v249 = vrot.slane %v248, 2
      %v250 = vadd.f32 %v248, %v249
      %v251 = vrot.slane %v250, 1
      %v252 = vadd.f32 %v250, %v251
      %v253 = vadd.f32 %v180, %v181
      %v254 = vrot.slane %v253, 4
      %v255 = vadd.f32 %v253, %v254
      %v256 = vrot.slane %v255, 2
      %v257 = vadd.f32 %v255, %v256
      %v258 = vrot.slane %v257, 1
      %v259 = vadd.f32 %v257, %v258
      %vm260 = vcmask 1040384
      %v261 = vsel %vm260, %v236, %v245
      %vm262 = vcmask 1041408
      %v263 = vsel %vm262, %v261, %v252
      %vm264 = vcmask 1042432
      %v265 = vsel %vm264, %v263, %v259
      %v266 = vld [vmem:[#allocation7] sm:$0xf]
      %v267 = vadd.f32 %v266, %v265
      %268 = vst [vmem:[#allocation7] sm:$0xf] %v267
    $region29: #{tpu_custom_call.1} parent=1 // pred_fallthru
      _
    // Predicated region
    $region30: #{tpu_custom_call.1} parent=1 // pred_check
      _
    $region31: #{tpu_custom_call.1} parent=1 // pred_check_branch
      %270 = sbr.rel (0) target = $region33
    $region32: #{tpu_custom_call.1} parent=1 // pred_region
      %s272 = ssub.s32 64, 64
      %273 = vsyncadd [#allocation4], %s272
      %s275 = sshll.u32 [#allocation7], 4
      %s276 = int_to_ptr.vmem [resolvable:$true] %s275
      %278 = dma.vmem_to_hbm [thread:$0]  %s276, 64, %s2, [#allocation4]
    $region33: #{tpu_custom_call.1} parent=1 // pred_fallthru
      _
    // Predicated region
    $region34: #{tpu_custom_call.1} parent=1 // pred_check
      _
    $region35: #{tpu_custom_call.1} parent=1 // pred_check_branch
      %280 = sbr.rel (0) target = $region37
    $region36: #{tpu_custom_call.1} parent=1 // pred_region
      %281 = dma.done [#allocation4], 64
    $region37: #{tpu_custom_call.1} parent=1 // pred_fallthru
      _
    %282 = vsyncpa [#allocation3], 1
    %283 = vsyncpa [#allocation6], 1
    %284 = vsyncpa [#allocation4], 1

</llo_original>
